<compile_context>
chip_gen: v7x
topology: tpu7x:2x2x1
jax: 0.10.0
libtpu: 0.0.40
codegen_flags: <defaults>
</compile_context>

<pallas_src>
import math

import jax
import jax.numpy as jnp
from jax.experimental import pallas as pl
from jax.experimental.pallas import tpu as pltpu

_LANE = 128
_BLOCK_BYTES = 1 << 20  # ~1 MiB per x block; in+out double-buffered ~= 4 MiB VMEM


def _dropconnect_kernel(scale_ref, x_ref, o_ref):
    """scale_ref: (N,) f32 in SMEM (scalar-prefetched).
    x_ref / o_ref: (1, tile_r, 128) blocks of one sample."""
    n = pl.program_id(0)
    s = scale_ref[n].astype(o_ref.dtype)          # scalar, input dtype
    o_ref[...] = x_ref[...] * s


def _choose_tile_r(num_rows, itemsize):
    """Byte-capped, 8-sublane-aligned row tile for a (·, 128) slab."""
    rows_budget = max(8, _BLOCK_BYTES // (_LANE * itemsize))
    if num_rows <= rows_budget:
        return num_rows                            # full extent (always legal)
    return max(8, (rows_budget // 8) * 8)


def drop_connect_pallas(x, u, keep_prob, training=True):
    """DropConnect forward.

    x: (N, ...) input tensor.
    u: (N,) per-sample uniforms (the torch.rand([N,1,1,1]) draw).
    """
    if not training:
        return x

    N = x.shape[0]
    F = math.prod(x.shape[1:])
    orig_shape = x.shape

    # Pad features only to the next 128 lanes (no pad for F % 128 == 0).
    F_pad = pl.cdiv(F, _LANE) * _LANE
    x2 = x.reshape(N, F)
    if F_pad != F:
        x2 = jnp.pad(x2, ((0, 0), (0, F_pad - F)))
    R = F_pad // _LANE
    x3 = x2.reshape(N, R, _LANE)

    tile_r = _choose_tile_r(R, x.dtype.itemsize)
    grid = (N, pl.cdiv(R, tile_r))

    # Per-sample scale, computed once: floor(keep_prob + u) / keep_prob.
    binary = jnp.floor(jnp.float32(keep_prob) + u.reshape(N).astype(jnp.float32))
    scale = binary / jnp.float32(keep_prob)        # (N,) f32, lives in SMEM

    out = pl.pallas_call(
        _dropconnect_kernel,
        out_shape=jax.ShapeDtypeStruct((N, R, _LANE), x.dtype),
        grid_spec=pltpu.PrefetchScalarGridSpec(
            num_scalar_prefetch=1,
            grid=grid,
            in_specs=[
                pl.BlockSpec((1, tile_r, _LANE), lambda n, j, s: (n, j, 0)),
            ],
            out_specs=pl.BlockSpec((1, tile_r, _LANE), lambda n, j, s: (n, j, 0)),
        ),
        compiler_params=pltpu.CompilerParams(
            dimension_semantics=("parallel", "parallel")),
    )(scale, x3)

    out = out.reshape(N, F_pad)
    if F_pad != F:
        out = out[:, :F]
    return out.reshape(orig_shape)


def drop_connect_reference(x, u, keep_prob):
    """Pure-JAX mirror of the PyTorch forward (training mode)."""
    bshape = (x.shape[0],) + (1,) * (x.ndim - 1)
    binary = jnp.floor(keep_prob + u.reshape(bshape).astype(jnp.float32))
    return x / keep_prob * binary.astype(x.dtype)


if __name__ == "__main__":
    import numpy as np

    key = jax.random.PRNGKey(0)
    kx, ku = jax.random.split(key)

    N, C, H, W = 2, 4, 16, 16
    keep_prob = 0.8

    x = jax.random.normal(kx, (N, C, H, W), jnp.float32)
    u = jax.random.uniform(ku, (N,), jnp.float32)   # torch.rand([N,1,1,1]) analogue

    # Training-mode forward through the Pallas kernel vs. reference.
    out = jax.block_until_ready(drop_connect_pallas(x, u, keep_prob, training=True))
    ref = jax.block_until_ready(drop_connect_reference(x, u, keep_prob))
    assert out.shape == x.shape
    np.testing.assert_allclose(np.asarray(out), np.asarray(ref), atol=1e-6, rtol=1e-6)

    # Exercise both mask branches deterministically (one drop, one keep).
    u_fixed = jnp.array([0.05, 0.95], jnp.float32)  # floor(0.85)=0, floor(1.75)=1
    out2 = jax.block_until_ready(drop_connect_pallas(x, u_fixed, keep_prob, training=True))
    ref2 = drop_connect_reference(x, u_fixed, keep_prob)
    np.testing.assert_allclose(np.asarray(out2), np.asarray(ref2), atol=1e-6, rtol=1e-6)
    assert float(jnp.abs(out2[0]).max()) == 0.0     # dropped sample is all zeros
    assert float(jnp.abs(out2[1]).max()) > 0.0      # kept sample is scaled copy

    # Non-128-multiple feature count (exercises the lane-pad / slice-back path).
    xr = jax.random.normal(kx, (4, 3, 5, 7), jnp.float32)
    ur = jax.random.uniform(ku, (4,), jnp.float32)
    out3 = jax.block_until_ready(drop_connect_pallas(xr, ur, keep_prob, training=True))
    ref3 = drop_connect_reference(xr, ur, keep_prob)
    np.testing.assert_allclose(np.asarray(out3), np.asarray(ref3), atol=1e-6, rtol=1e-6)

    # bf16 path (multiply stays in bf16 in-kernel).
    xb = x.astype(jnp.bfloat16)
    out4 = jax.block_until_ready(drop_connect_pallas(xb, u_fixed, keep_prob, training=True))
    ref4 = drop_connect_reference(xb, u_fixed, keep_prob)
    np.testing.assert_allclose(np.asarray(out4, dtype=np.float32),
                               np.asarray(ref4, dtype=np.float32),
                               atol=1e-2, rtol=2e-2)

    # Eval mode: identity.
    out_eval = drop_connect_pallas(x, u, keep_prob, training=False)
    np.testing.assert_allclose(np.asarray(out_eval), np.asarray(x))

    print("KERNEL_OK")
</pallas_src>

<mosaic_0001>
module attributes {stable_mosaic.version = 11 : i64} {
  func.func @_dropconnect_kernel(%arg0: i32, %arg1: i32, %arg2: memref<2xf32, #tpu.memory_space<smem>>, %arg3: memref<1x8x128xf32, #tpu.memory_space<vmem>>, %arg4: memref<1x8x128xf32, #tpu.memory_space<vmem>>) attributes {dimension_semantics = [#tpu.dimension_semantics<parallel>, #tpu.dimension_semantics<parallel>], iteration_bounds = array<i64: 2, 1>, scalar_prefetch = 1 : i64, scratch_operands = 0 : i64, tpu.core_type = #tpu.core_type<tc>, window_params = [{transform_indices = @transform_0, window_bounds = array<i64: 1, 8, 128>}, {transform_indices = @transform_1, window_bounds = array<i64: 1, 8, 128>}]} {
    %0 = arith.index_cast %arg0 : i32 to index
    %1 = memref.load %arg2[%0] : memref<2xf32, #tpu.memory_space<smem>>
    %c0 = arith.constant 0 : index
    %c0_0 = arith.constant 0 : index
    %c0_1 = arith.constant 0 : index
    %2 = vector.load %arg3[%c0, %c0_0, %c0_1] : memref<1x8x128xf32, #tpu.memory_space<vmem>>, vector<1x8x128xf32>
    %3 = vector.broadcast %1 : f32 to vector<1x8x128xf32>
    %4 = arith.mulf %2, %3 : vector<1x8x128xf32>
    %c0_2 = arith.constant 0 : index
    %c0_3 = arith.constant 0 : index
    %c0_4 = arith.constant 0 : index
    %5 = vector.load %arg4[%c0_2, %c0_3, %c0_4] : memref<1x8x128xf32, #tpu.memory_space<vmem>>, vector<1x8x128xf32>
    tpu.vector_store %arg4[%c0_2, %c0_3, %c0_4], %4 {strides = array<i32>} : memref<1x8x128xf32, #tpu.memory_space<vmem>>, vector<1x8x128xf32>,
    return
  }
  func.func @transform_0(%arg0: i32, %arg1: i32, %arg2: memref<2xf32, #tpu.memory_space<smem>>) -> (i32, i32, i32) {
    %c0_i32 = arith.constant 0 : i32
    %c0_i32_0 = arith.constant 0 : i32
    return %arg0, %arg1, %c0_i32 : i32, i32, i32
  }
  func.func @transform_1(%arg0: i32, %arg1: i32, %arg2: memref<2xf32, #tpu.memory_space<smem>>) -> (i32, i32, i32) {
    %c0_i32 = arith.constant 0 : i32
    %c0_i32_0 = arith.constant 0 : i32
    return %arg0, %arg1, %c0_i32 : i32, i32, i32
  }
}

</mosaic_0001>

<llo_original>
// kernel: tpu_custom_call.1
$region0: #{tpu_custom_call.1}
  #allocation0 [shape = 'u32[]', space=smem, size = 0x4, offset = 0x4, fixed_abs, tag = 'smem constant byte address 0x4 - core index']
  #allocation1 [shape = 'u32[144,128]{1,0:T(1,128)}', space=vmem, size = 0x12000, scoped, tag = 'internal scratch']
  #allocation2 [shape = 's32[1]{0}', space=sflag, size = 0x4, scoped, tag = 'scoped memory for tpu_custom_call.1']
  #allocation3 [shape = 'u8[512]{0}', space=smem, size = 0x200, scoped, tag = 'prefetched SMEM operand 0']
  %s0 = inlined_call_operand.hbm [shape: f32[2], index: 0, kind: input, shape index: {}]
  %s1 = inlined_call_operand.hbm [shape: f32[2,8,128], index: 1, kind: input, shape index: {}]
  %s2 = inlined_call_operand.hbm [shape: f32[2,8,128], index: 2, kind: output, shape index: {}]
  %s3 = sld [smem:[#allocation0]]
  $region41: #{tpu_custom_call.1} parent=0
    _
  %s5 = ssub.s32 1, %s3
  %s6 = scalar_select 0, %s5, %s3
  %8 = dma.hbm_to_smem %s0, 16, [#allocation3], [#allocation2]
  %9 = dma.done [#allocation2], 16
  %10 = sfence
  $region1: #{tpu_custom_call.1} parent=0
    #allocation4 [shape = 'u8[8192]{0}', space=vmem, size = 0x2000, scoped, tag = 'input window, operand 1']
    #allocation5 [shape = 's32[2]{0}', space=sflag, size = 0x8, scoped, tag = 'scoped memory for tpu_custom_call.1']
    #allocation6 [shape = 's32[2]{0}', space=sflag, size = 0x8, scoped, tag = 'scoped memory for tpu_custom_call.1']
    #allocation7 [shape = 'u8[8192]{0}', space=vmem, size = 0x2000, scoped, tag = 'output window, operand 0']
    %11 = vsyncpa [#allocation5], 0
    %s12 = scalar_lea.sflag [#allocation5], 1
    %13 = vsyncpa %s12, 0
    %14 = vsyncpa [#allocation6], 0
    %s15 = scalar_lea.sflag [#allocation6], 1
    %16 = vsyncpa %s15, 0
    loop: start=0, step=1, limit=4
    $region2: #{tpu_custom_call.1} parent=1 // loop_pre_header
      _
    $region3: #{tpu_custom_call.1} parent=1 // loop_header
      %s18 = sphi 0, %s22
      %p19 = scmp.ge.s32.totalorder %s18, 4
      %s25 = sphi 0, %s37
      %s26 = sphi 0, %s33
      %s27 = sphi 0, %s25
      %s28 = sphi 0, %s26
      %s29 = sphi 0, %s27
      %s30 = sphi 0, %s28
      %s42 = sphi 0, %s44
      %s45 = sphi 0, %s42
      %s46 = sphi 0, %s45
      %s62 = sphi 0, %s46
      %s70 = sphi 0, %s72
      %s73 = sphi 0, %s70
      %s74 = sphi 0, %s73
      %s90 = sphi 0, %s74
    $region4: #{tpu_custom_call.1} parent=1 // loop_header_branch
      %21 = sbr.rel (%p19) target = $region8
    $region5: #{tpu_custom_call.1} parent=1 // loop_body
      %s23 = ssub.s32 %s18, 1
      %s24 = ssub.s32 %s18, 2
      %s31 = sadd.s32 1, %s26
      %p32 = scmp.ge.s32.totalorder %s31, 1
      %s33 = scalar_select %p32, 0, %s31
      %s34 = sadd.s32 1, %s25
      %s35 = scalar_select %p32, %s34, %s25
      %p36 = scmp.ge.s32.totalorder %s35, 2
      %s37 = scalar_select %p36, 0, %s35
      %s38 = ssub.s32 %s25, %s37
      %s39 = ssub.s32 %s26, %s33
      %s40 = sor.u32 %s38, %s39
      %p41 = scmp.eq.s32.totalorder %s40, 0
      %s43 = sadd.s32 %s42, 1
      %s44 = scalar_select %p41, %s42, %s43
      %p47 = pneg %p41
      %p48 = scmp.eq.s32.totalorder %s18, 1
      %p49 = por %p47, %p48
      %p50 = scmp.ne.s32.totalorder %s42, %s45
      %p51 = scmp.eq.s32.totalorder %s18, 0
      %p52 = por %p50, %p51
      %p53 = scmp.ne.s32.totalorder %s42, %s45
      %p54 = scmp.eq.s32.totalorder %s23, 1
      %p55 = por %p53, %p54
      %p56 = scmp.ne.s32.totalorder %s45, %s46
      %p57 = scmp.eq.s32.totalorder %s23, 0
      %p58 = por %p56, %p57
      %p59 = scmp.ne.s32.totalorder %s45, %s46
      %p60 = scmp.eq.s32.totalorder %s24, 1
      %p61 = por %p59, %p60
      %p63 = scmp.ne.s32.totalorder %s46, %s62
      %p64 = scmp.eq.s32.totalorder %s24, 0
      %p65 = por %p63, %p64
      %s66 = ssub.s32 %s25, %s37
      %s67 = ssub.s32 %s26, %s33
      %s68 = sor.u32 %s66, %s67
      %p69 = scmp.eq.s32.totalorder %s68, 0
      %s71 = sadd.s32 %s70, 1
      %s72 = scalar_select %p69, %s70, %s71
      %p75 = pneg %p69
      %p76 = scmp.eq.s32.totalorder %s18, 1
      %p77 = por %p75, %p76
      %p78 = scmp.ne.s32.totalorder %s70, %s73
      %p79 = scmp.eq.s32.totalorder %s18, 0
      %p80 = por %p78, %p79
      %p81 = scmp.ne.s32.totalorder %s70, %s73
      %p82 = scmp.eq.s32.totalorder %s23, 1
      %p83 = por %p81, %p82
      %p84 = scmp.ne.s32.totalorder %s73, %s74
      %p85 = scmp.eq.s32.totalorder %s23, 0
      %p86 = por %p84, %p85
      %p87 = scmp.ne.s32.totalorder %s73, %s74
      %p88 = scmp.eq.s32.totalorder %s24, 1
      %p89 = por %p87, %p88
      %p91 = scmp.ne.s32.totalorder %s74, %s90
      %p92 = scmp.eq.s32.totalorder %s24, 0
      %p93 = por %p91, %p92
      %p94 = scmp.le.s32.totalorder 1, %s18
      %p95 = scmp.lt.s32.totalorder %s18, 3
      %p96 = pnand %p94, %p95
      %p97 = pneg %p96
      // Predicated region
      $region9: #{tpu_custom_call.1} parent=5 // pred_check
        _
      $region10: #{tpu_custom_call.1} parent=5 // pred_check_branch
        %99 = sbr.rel (%p96) target = $region12
      $region11: #{tpu_custom_call.1} parent=5 // pred_region
        %s100 = ssub.s32 %s18, 1
      $region12: #{tpu_custom_call.1} parent=5 // pred_fallthru
        _
      %p101 = scmp.lt.s32.totalorder %s18, 2
      // Predicated region
      $region13: #{tpu_custom_call.1} parent=5 // pred_check
        %p102 = pneg %p101
      $region14: #{tpu_custom_call.1} parent=5 // pred_check_branch
        %104 = sbr.rel (%p102) target = $region16
      $region15: #{tpu_custom_call.1} parent=5 // pred_region
        // Predicated region
        $region17: #{tpu_custom_call.1} parent=15 // pred_check
          %p105 = pneg %p52
        $region18: #{tpu_custom_call.1} parent=15 // pred_check_branch
          %107 = sbr.rel (%p105) target = $region20
        $region19: #{tpu_custom_call.1} parent=15 // pred_region
          %s108 = sand.u32 %s42, 1
          %s109 = scalar_lea.sflag [#allocation5], %s108
          %s110 = sand.u32 %s42, 1
          %s111 = smul.addr %s110, 8
          %s112 = scalar_lea.vmem [#allocation4], %s111
          %s114 = ssub.s32 128, 128
          %115 = vsyncadd %s109, %s114
          %s116 = sadd.s32 %s26, %s25
          %s117 = smul.addr %s116, 128
          %s118 = scalar_lea.hbm %s1, %s117
          %s120 = sshll.u32 %s112, 4
          %s121 = int_to_ptr.vmem [resolvable:$true] %s120
          %123 = dma.hbm_to_vmem [thread:$0]  %s118, 128, %s121, %s109
        $region20: #{tpu_custom_call.1} parent=15 // pred_fallthru
          _
      $region16: #{tpu_custom_call.1} parent=5 // pred_fallthru
        _
      %p124 = scmp.le.s32.totalorder 1, %s18
      %p125 = scmp.lt.s32.totalorder %s18, 3
      %p126 = pnand %p124, %p125
      %p127 = pneg %p126
      // Predicated region
      $region21: #{tpu_custom_call.1} parent=5 // pred_check
        _
      $region22: #{tpu_custom_call.1} parent=5 // pred_check_branch
        %129 = sbr.rel (%p126) target = $region24
      $region23: #{tpu_custom_call.1} parent=5 // pred_region
        %s130 = ssub.s32 %s18, 1
        %s131 = sand.u32 %s45, 1
        %s132 = scalar_lea.sflag [#allocation5], %s131
        %s133 = sand.u32 %s45, 1
        %s134 = smul.addr %s133, 8
        %s135 = scalar_lea.vmem [#allocation4], %s134
        // Predicated region
        $region25: #{tpu_custom_call.1} parent=23 // pred_check
          %p136 = pneg %p58
        $region26: #{tpu_custom_call.1} parent=23 // pred_check_branch
          %138 = sbr.rel (%p136) target = $region28
        $region27: #{tpu_custom_call.1} parent=23 // pred_region
          %139 = dma.done %s132, 128
        $region28: #{tpu_custom_call.1} parent=23 // pred_fallthru
          _
        %s140 = sand.u32 %s45, 1
        %s141 = scalar_lea.sflag [#allocation5], %s140
        %s142 = sand.u32 %s45, 1
        %s143 = smul.addr %s142, 8
        %s144 = scalar_lea.vmem [#allocation4], %s143
        %p145 = pneg %p58
        %p146 = pneg %p55
        %p147 = pneg %p86
        %p148 = pneg %p83
        %s149 = sand.u32 %s73, 1
        %s150 = scalar_lea.sflag [#allocation6], %s149
        %s151 = sand.u32 %s73, 1
        %s152 = smul.addr %s151, 8
        %s153 = scalar_lea.vmem [#allocation7], %s152
        %s154 = sld [smem:[#allocation3 + %s27]]
        %v155 = vld [vmem:[%s135] sm:$0xff]
        %v156 = vstv %s154
        %v157 = vmul.f32 %v155, %v156
        %158 = vst [vmem:[%s153] sm:$0xff] %v157
        %s159 = sand.u32 %s73, 1
        %s160 = scalar_lea.sflag [#allocation6], %s159
        %s161 = sand.u32 %s73, 1
        %s162 = smul.addr %s161, 8
        %s163 = scalar_lea.vmem [#allocation7], %s162
        // Predicated region
        $region29: #{tpu_custom_call.1} parent=23 // pred_check
          %p164 = pneg %p83
        $region30: #{tpu_custom_call.1} parent=23 // pred_check_branch
          %166 = sbr.rel (%p164) target = $region32
        $region31: #{tpu_custom_call.1} parent=23 // pred_region
          %s168 = ssub.s32 128, 128
          %169 = vsyncadd %s160, %s168
          %s170 = sadd.s32 %s28, %s27
          %s171 = smul.addr %s170, 128
          %s172 = scalar_lea.hbm %s2, %s171
          %s174 = sshll.u32 %s163, 4
          %s175 = int_to_ptr.vmem [resolvable:$true] %s174
          %177 = dma.vmem_to_hbm [thread:$0]  %s175, 128, %s172, %s160
        $region32: #{tpu_custom_call.1} parent=23 // pred_fallthru
          _
      $region24: #{tpu_custom_call.1} parent=5 // pred_fallthru
        _
      %p178 = scmp.le.s32.totalorder 2, %s18
      // Predicated region
      $region33: #{tpu_custom_call.1} parent=5 // pred_check
        %p179 = pneg %p178
      $region34: #{tpu_custom_call.1} parent=5 // pred_check_branch
        %181 = sbr.rel (%p179) target = $region36
      $region35: #{tpu_custom_call.1} parent=5 // pred_region
        %s182 = ssub.s32 %s18, 2
        // Predicated region
        $region37: #{tpu_custom_call.1} parent=35 // pred_check
          %p183 = pneg %p89
        $region38: #{tpu_custom_call.1} parent=35 // pred_check_branch
          %185 = sbr.rel (%p183) target = $region40
        $region39: #{tpu_custom_call.1} parent=35 // pred_region
          %s186 = sand.u32 %s74, 1
          %s187 = scalar_lea.sflag [#allocation6], %s186
          %s188 = sand.u32 %s74, 1
          %s189 = smul.addr %s188, 8
          %s190 = scalar_lea.vmem [#allocation7], %s189
          %191 = dma.done %s187, 128
        $region40: #{tpu_custom_call.1} parent=35 // pred_fallthru
          _
      $region36: #{tpu_custom_call.1} parent=5 // pred_fallthru
        _
    $region6: #{tpu_custom_call.1} parent=1 // loop_footer
      %s22 = sadd.s32 1, %s18
    $region7: #{tpu_custom_call.1} parent=1 // loop_footer_branch
      %17 = sbr.rel target = $region3
    $region8: #{tpu_custom_call.1} parent=1 // loop_exit
      _
    %192 = vsyncpa [#allocation5], 1
    %s193 = scalar_lea.sflag [#allocation5], 1
    %194 = vsyncpa %s193, 1
    %195 = vsyncpa [#allocation6], 1
    %s196 = scalar_lea.sflag [#allocation6], 1
    %197 = vsyncpa %s196, 1

</llo_original>
